<compile_context>
chip_gen: v5e
topology: v5e:2x2
jax: 0.10.0
libtpu: 0.0.40
codegen_flags: <defaults>
</compile_context>

<pallas_src>
import jax
import jax.numpy as jnp
from jax.experimental import pallas as pl
from jax.experimental.pallas import tpu as pltpu

_LANE = 128


def _chomp_copy_kernel(x_ref, o_ref):
    # Pure tile copy: the trailing crop is realized entirely by the grid /
    # index_map, which never visits the chomped tail of the input.
    o_ref[...] = x_ref[...]


def _chomp_slice_kernel(x_ref, o_ref):
    # x_ref holds the full (padded) time axis for this row block; statically
    # drop the trailing lanes.  Used when L_out is not a multiple of 128 so
    # both BlockSpecs stay layout-legal (full array dims).
    o_ref[...] = x_ref[:, : o_ref.shape[-1]]


def _row_pack(dtype) -> int:
    # Sublane packing factor: 8 rows for 32-bit, 16 for 16-bit, 32 for 8-bit.
    itemsize = jnp.dtype(dtype).itemsize
    return 8 * max(1, 4 // itemsize)


def chomp1d(x, chomp_size):
    """Chomp1d.forward: x[:, :, :-chomp_size] for x of shape (N, C, L)."""
    assert chomp_size > 0, "chomp_size must be positive (matches x[:, :, :-k])"
    N, C, L = x.shape
    L_out = L - chomp_size
    assert L_out > 0, "chomp_size must be smaller than the time length"

    # ---- glue: free (metadata-only) reshape to a lane-dense 2D layout ----
    R = N * C
    x2 = x.reshape(R, L)

    itemsize = jnp.dtype(x.dtype).itemsize
    rpack = _row_pack(x.dtype)
    block_budget = 2 * 1024 * 1024  # bytes per block buffer

    if L_out % _LANE == 0:
        # Aligned path: tile the kept time prefix in multiples of 128 lanes
        # (unmasked stores); the chomped tail is never DMA'd.
        max_tl = max(_LANE, (block_budget // (rpack * itemsize)) // _LANE * _LANE)
        TL = min(L_out, 2048, max_tl)
        max_tr = max(rpack, (block_budget // (TL * itemsize)) // rpack * rpack)
        TR = R if R <= max_tr else max_tr
        in_tl, out_tl = TL, TL
        kernel = _chomp_copy_kernel
        grid = (pl.cdiv(R, TR), pl.cdiv(L_out, TL))
        in_spec = pl.BlockSpec((TR, in_tl), lambda i, j: (i, j))
        out_spec = pl.BlockSpec((TR, out_tl), lambda i, j: (i, j))
        semantics = ("parallel", "parallel")
    else:
        # Unaligned L_out: keep the whole time axis per block (full-dim block
        # shapes are always layout-legal) and crop statically in the kernel.
        max_tr = max(rpack, (block_budget // (L * itemsize)) // rpack * rpack)
        TR = R if R <= max_tr else max_tr
        in_tl, out_tl = L, L_out
        kernel = _chomp_slice_kernel
        grid = (pl.cdiv(R, TR),)
        in_spec = pl.BlockSpec((TR, in_tl), lambda i: (i, 0))
        out_spec = pl.BlockSpec((TR, out_tl), lambda i: (i, 0))
        semantics = ("parallel",)

    # Double-buffered input + output blocks plus slack; clamp to stay well
    # under v7x's 64 MiB physical VMEM while covering v5e's 16 MiB default.
    vmem_bytes = 2 * TR * (in_tl + out_tl) * itemsize + (2 << 20)
    vmem_bytes = int(min(max(vmem_bytes, 16 << 20), 56 << 20))

    out2 = pl.pallas_call(
        kernel,
        out_shape=jax.ShapeDtypeStruct((R, L_out), x.dtype),
        grid=grid,
        in_specs=[in_spec],
        out_specs=out_spec,
        compiler_params=pltpu.CompilerParams(
            dimension_semantics=semantics,
            vmem_limit_bytes=vmem_bytes),
    )(x2)

    # back to (N, C, L_out); output is freshly materialized, i.e. contiguous
    # (matches .contiguous() in the PyTorch module).
    return out2.reshape(N, C, L_out)


if __name__ == "__main__":
    key = jax.random.PRNGKey(0)

    # Typical TCN usage: x is the output of a causally padded Conv1d where
    # padding = (kernel_size - 1) * dilation (= 8 here), removed by Chomp1d.
    N, C, L, chomp = 2, 32, 136, 8
    x = jax.random.normal(key, (N, C, L), dtype=jnp.float32)
    y = chomp1d(x, chomp)
    jax.block_until_ready(y)
    assert y.shape == (N, C, L - chomp), "shape mismatch (aligned path)"
    assert jnp.array_equal(y, x[:, :, : L - chomp]), "chomp mismatch (aligned path)"

    # Exercise the unaligned kept-length path (L_out not a multiple of 128).
    N2, C2, L2, chomp2 = 2, 8, 45, 5
    xb = jax.random.normal(jax.random.PRNGKey(0), (N2, C2, L2), dtype=jnp.float32)
    yb = chomp1d(xb, chomp2)
    jax.block_until_ready(yb)
    assert yb.shape == (N2, C2, L2 - chomp2), "shape mismatch (unaligned path)"
    assert jnp.array_equal(yb, xb[:, :, : L2 - chomp2]), "chomp mismatch (unaligned path)"

    print("KERNEL_OK")
</pallas_src>

<mosaic_0001>
module attributes {stable_mosaic.version = 11 : i64} {
  func.func @_chomp_copy_kernel(%arg0: i32, %arg1: i32, %arg2: memref<64x128xf32, #tpu.memory_space<vmem>>, %arg3: memref<64x128xf32, #tpu.memory_space<vmem>>) attributes {dimension_semantics = [#tpu.dimension_semantics<parallel>, #tpu.dimension_semantics<parallel>], iteration_bounds = array<i64: 1, 1>, scalar_prefetch = 0 : i64, scratch_operands = 0 : i64, tpu.core_type = #tpu.core_type<tc>, window_params = [{transform_indices = @transform_0, window_bounds = array<i64: 64, 128>}, {transform_indices = @transform_1, window_bounds = array<i64: 64, 128>}]} {
    %c0 = arith.constant 0 : index
    %c0_0 = arith.constant 0 : index
    %0 = vector.load %arg2[%c0, %c0_0] : memref<64x128xf32, #tpu.memory_space<vmem>>, vector<64x128xf32>
    %c0_1 = arith.constant 0 : index
    %c0_2 = arith.constant 0 : index
    %1 = vector.load %arg3[%c0_1, %c0_2] : memref<64x128xf32, #tpu.memory_space<vmem>>, vector<64x128xf32>
    tpu.vector_store %arg3[%c0_1, %c0_2], %0 {strides = array<i32>} : memref<64x128xf32, #tpu.memory_space<vmem>>, vector<64x128xf32>,
    return
  }
  func.func @transform_0(%arg0: i32, %arg1: i32) -> (i32, i32) {
    %c0_i32 = arith.constant 0 : i32
    return %arg0, %arg1 : i32, i32
  }
  func.func @transform_1(%arg0: i32, %arg1: i32) -> (i32, i32) {
    %c0_i32 = arith.constant 0 : i32
    return %arg0, %arg1 : i32, i32
  }
}

</mosaic_0001>

<llo_original>
// kernel: tpu_custom_call.1
$region0: #{tpu_custom_call.1}
  #allocation0 [shape = 'u32[]', space=smem, size = 0x4, offset = 0x4, fixed_abs, tag = 'smem constant byte address 0x4 - core index']
  #allocation1 [shape = 'u32[72,128]{1,0:T(1,128)}', space=vmem, size = 0x9000, scoped, tag = 'internal scratch']
  %s0 = inlined_call_operand.hbm [shape: f32[64,136], index: 0, kind: input, shape index: {}]
  %s1 = inlined_call_operand.hbm [shape: f32[64,128], index: 1, kind: output, shape index: {}]
  %s2 = sld [smem:[#allocation0]]
  $region18: #{tpu_custom_call.1} parent=0
    _
  %s4 = ssub.s32 1, %s2
  %s5 = scalar_select 0, %s4, %s2
  $region1: #{tpu_custom_call.1} parent=0
    #allocation2 [shape = 'u8[32768]{0}', space=vmem, size = 0x8000, scoped, tag = 'input window, operand 0, single buffered']
    #allocation3 [shape = 's32[1]{0}', space=sflag, size = 0x4, scoped, tag = 'scoped memory for tpu_custom_call.1']
    #allocation4 [shape = 's32[1]{0}', space=sflag, size = 0x4, scoped, tag = 'scoped memory for tpu_custom_call.1']
    #allocation5 [shape = 'u8[32768]{0}', space=vmem, size = 0x8000, scoped, tag = 'output window, operand 0, single buffered']
    %6 = vsyncpa [#allocation3], 0
    %7 = vsyncpa [#allocation4], 0
    // Predicated region
    $region2: #{tpu_custom_call.1} parent=1 // pred_check
      _
    $region3: #{tpu_custom_call.1} parent=1 // pred_check_branch
      %9 = sbr.rel (0) target = $region5
    $region4: #{tpu_custom_call.1} parent=1 // pred_region
      %11 = vsyncadd [#allocation3], 0
      %s12 = sshll.u32 %s0, 4
      %s13 = int_to_ptr.hbm [resolvable:$true] %s12
      %s14 = sshll.u32 [#allocation2], 4
      %s15 = int_to_ptr.vmem [resolvable:$true] %s14
      %20 = dma.hbm_to_vmem [thread:$0]  %s13, 1024, %s15, [#allocation3], 256, 128, 8
    $region5: #{tpu_custom_call.1} parent=1 // pred_fallthru
      _
    // Predicated region
    $region6: #{tpu_custom_call.1} parent=1 // pred_check
      _
    $region7: #{tpu_custom_call.1} parent=1 // pred_check_branch
      %22 = sbr.rel (0) target = $region9
    $region8: #{tpu_custom_call.1} parent=1 // pred_region
      %24 = dma.done [#allocation3], 1024
    $region9: #{tpu_custom_call.1} parent=1 // pred_fallthru
      _
    %v25 = vld [vmem:[#allocation2] sm:$0xff]
    %v26 = vld [vmem:[#allocation2 + $0x8] sm:$0xff]
    %v27 = vld [vmem:[#allocation2 + $0x10] sm:$0xff]
    %v28 = vld [vmem:[#allocation2 + $0x18] sm:$0xff]
    %v29 = vld [vmem:[#allocation2 + $0x20] sm:$0xff]
    %v30 = vld [vmem:[#allocation2 + $0x28] sm:$0xff]
    %v31 = vld [vmem:[#allocation2 + $0x30] sm:$0xff]
    %v32 = vld [vmem:[#allocation2 + $0x38] sm:$0xff]
    %33 = vst [vmem:[#allocation5] sm:$0xff] %v25
    %34 = vst [vmem:[#allocation5 + $0x8] sm:$0xff] %v26
    %35 = vst [vmem:[#allocation5 + $0x10] sm:$0xff] %v27
    %36 = vst [vmem:[#allocation5 + $0x18] sm:$0xff] %v28
    %37 = vst [vmem:[#allocation5 + $0x20] sm:$0xff] %v29
    %38 = vst [vmem:[#allocation5 + $0x28] sm:$0xff] %v30
    %39 = vst [vmem:[#allocation5 + $0x30] sm:$0xff] %v31
    %40 = vst [vmem:[#allocation5 + $0x38] sm:$0xff] %v32
    // Predicated region
    $region10: #{tpu_custom_call.1} parent=1 // pred_check
      _
    $region11: #{tpu_custom_call.1} parent=1 // pred_check_branch
      %42 = sbr.rel (0) target = $region13
    $region12: #{tpu_custom_call.1} parent=1 // pred_region
      %44 = vsyncadd [#allocation4], 0
      %s45 = sshll.u32 [#allocation5], 4
      %s46 = int_to_ptr.vmem [resolvable:$true] %s45
      %s47 = sshll.u32 %s1, 4
      %s48 = int_to_ptr.hbm [resolvable:$true] %s47
      %53 = dma.vmem_to_hbm [thread:$0]  %s46, 1024, %s48, [#allocation4], 128, 128, 8
    $region13: #{tpu_custom_call.1} parent=1 // pred_fallthru
      _
    // Predicated region
    $region14: #{tpu_custom_call.1} parent=1 // pred_check
      _
    $region15: #{tpu_custom_call.1} parent=1 // pred_check_branch
      %55 = sbr.rel (0) target = $region17
    $region16: #{tpu_custom_call.1} parent=1 // pred_region
      %57 = dma.done [#allocation4], 1024
    $region17: #{tpu_custom_call.1} parent=1 // pred_fallthru
      _
    %58 = vsyncpa [#allocation3], 1
    %59 = vsyncpa [#allocation4], 1

</llo_original>
